<compile_context>
chip_gen: v5e
topology: v5e:2x2
jax: 0.10.0
libtpu: 0.0.40
codegen_flags: <defaults>
</compile_context>

<pallas_src>
import functools

import jax
import jax.numpy as jnp
from jax.experimental import pallas as pl
from jax.experimental.pallas import tpu as pltpu

DEFAULT_MARGIN = 2.0
EPS = 1e-6  # F.pairwise_distance default eps (added to the elementwise difference)


def _cdiv(a, b):
    return (a + b - 1) // b


def _round_up(x, m):
    return ((x + m - 1) // m) * m


def _tpu_caps():
    """Best-effort (VMEM bytes per TensorCore, TensorCores per chip) detection."""
    vmem_cap = None
    n_cores = 1
    try:
        kind = jax.devices()[0].device_kind.lower()
    except Exception:
        kind = ""
    try:
        info = pltpu.get_tpu_info()
        vmem_cap = getattr(info, "vmem_capacity_bytes", None)
        for attr in ("num_cores", "core_count", "num_tensorcores", "tensorcore_count"):
            val = getattr(info, attr, None)
            if isinstance(val, int) and val > 0:
                n_cores = val
                break
    except Exception:
        pass
    if vmem_cap is None:
        # 128 MiB on v4/v5/v6; conservative 64 MiB default otherwise.
        if any(tag in kind for tag in ("v4", "v5", "v6")):
            vmem_cap = 128 * 1024 * 1024
        else:
            vmem_cap = 64 * 1024 * 1024
    if "v7" in kind:
        n_cores = max(n_cores, 2)                 # 2 TensorCores per chip
        vmem_cap = min(vmem_cap, 64 * 1024 * 1024)  # 64 MiB per TensorCore
    return int(vmem_cap), int(n_cores)


def _contrastive_kernel(x1_ref, x2_ref, lab_ref, out_ref, *d2_scratch, margin,
                        batch, tile_rows, tiles_per_slice, d_tiles,
                        label_resident, needs_mask):
    s = pl.program_id(0)   # slice axis (maps to a TensorCore on v7x)
    t = pl.program_id(1)   # batch-tile reduction axis
    k = pl.program_id(2)   # feature-chunk reduction axis

    tile_idx = s * tiles_per_slice + t
    row0 = tile_idx * tile_rows

    # Output block is VMEM-resident across (t, k): init once, accumulate into it.
    @pl.when(jnp.logical_and(t == 0, k == 0))
    def _init_out():
        out_ref[...] = jnp.zeros_like(out_ref)

    # Native-dtype DMA; do the math in f32 vregs.
    x1 = x1_ref[...].astype(jnp.float32)              # (TB, TD)
    x2 = x2_ref[...].astype(jnp.float32)              # (TB, TD)
    diff = x1 - x2 + EPS
    d2_part = jnp.sum(diff * diff, axis=-1, keepdims=True)   # (TB, 1)

    def _accumulate(d2):
        d = jnp.sqrt(d2)
        hinge = jnp.maximum(margin - d, 0.0)
        if label_resident:
            start = pl.multiple_of(row0, tile_rows)
            lab = lab_ref[pl.ds(start, tile_rows), :].astype(jnp.float32)
        else:
            lab = lab_ref[...].astype(jnp.float32)
        # (1 - label) * d^2 + label * clamp(margin - d, 0)^2
        per_ex = (1.0 - lab) * d2 + lab * (hinge * hinge)     # (TB, 1)

        def _add(vals):
            out_ref[...] = out_ref[...] + jnp.sum(vals, axis=0, keepdims=True)

        if needs_mask:
            # Only tiles that touch the batch boundary pay for the mask.
            is_ragged = (row0 + tile_rows) > batch

            @pl.when(is_ragged)
            def _masked():
                rows = row0 + jax.lax.broadcasted_iota(jnp.int32, per_ex.shape, 0)
                _add(jnp.where(rows < batch, per_ex, 0.0))

            @pl.when(jnp.logical_not(is_ragged))
            def _plain():
                _add(per_ex)
        else:
            _add(per_ex)

    if d_tiles == 1:
        _accumulate(d2_part)
    else:
        d2_ref = d2_scratch[0]

        @pl.when(k == 0)
        def _zero_d2():
            d2_ref[...] = jnp.zeros_like(d2_ref)

        d2_ref[...] = d2_ref[...] + d2_part

        @pl.when(k == d_tiles - 1)
        def _finish_rows():
            _accumulate(d2_ref[...])

    @pl.when(jnp.logical_and(t == pl.num_programs(1) - 1, k == d_tiles - 1))
    def _finalize():
        # Per-slice partial mean, lane-dense (8, 128) block, one HBM writeback.
        out_ref[...] = out_ref[...] * (1.0 / batch)


def contrastive_loss(output1, output2, label, *, margin=DEFAULT_MARGIN,
                     block_rows=None, block_cols=None, label_resident=None):
    """output1/output2: (B, D); label: (B,) or (B, 1). Returns scalar f32 loss."""
    B, D = output1.shape
    label = jnp.asarray(label).reshape(B, 1).astype(jnp.float32)

    vmem_cap, n_cores = _tpu_caps()
    vmem_limit = int(min((vmem_cap * 3) // 4, 100 * 1024 * 1024))
    input_budget = (vmem_limit * 2) // 3
    itemsize = jnp.dtype(output1.dtype).itemsize

    if label_resident is None:
        label_resident = B <= 8192   # resident label block stays a few MiB at most

    # Feature-axis tiling (only needed for very wide D; keeps footprint in VMEM).
    if block_cols is not None:
        td = int(block_cols)
        if td != D and (D % td != 0 or td % 128 != 0):
            raise ValueError("block_cols must equal D or be a multiple of 128 dividing D")
    elif D % 128 == 0 and 4 * D * itemsize * 256 > input_budget:
        td_cap = max(128, ((input_budget // (256 * 4 * itemsize)) // 128) * 128)
        td = 128
        for cand in range(td_cap, 127, -128):
            if D % cand == 0:
                td = cand
                break
    else:
        td = D
    d_tiles = D // td

    # Batch-tile sizing against the double-buffered VMEM budget.
    bytes_per_row = 4 * td * itemsize            # 2 inputs x 2 buffers
    if not label_resident:
        bytes_per_row += 2 * 128 * 4             # streamed, lane-padded label block
    if d_tiles > 1:
        bytes_per_row += 128 * 4                 # (TB, 1) d^2 scratch, lane-padded
    if block_rows is None:
        # Cap TB: per docs, 512-1024 row tiles already reach ~85% of HBM roofline,
        # and huge TB makes the lane-sparse per-example tail dominate for small D.
        block_rows = min(max(input_budget // bytes_per_row, 8), 1024)
    tb = max(8, min(_round_up(block_rows, 8), _round_up(B, 8)))

    total_tiles = _cdiv(B, tb)
    n_slices = 2 if (n_cores >= 2 and total_tiles >= 2) else 1
    tiles_per_slice = _cdiv(total_tiles, n_slices)
    b_padded = n_slices * tiles_per_slice * tb
    pad = b_padded - B

    # Per-step VMEM footprint guard (v7x has only 64 MiB per TensorCore).
    resident_label_bytes = 2 * b_padded * 128 * 4 if label_resident else 0
    step_bytes = (4 * tb * td * itemsize
                  + (0 if label_resident else 2 * tb * 128 * 4)
                  + (tb * 128 * 4 if d_tiles > 1 else 0)
                  + resident_label_bytes + 2 * 8 * 128 * 4)
    if step_bytes > vmem_limit:
        raise ValueError(
            f"per-step VMEM footprint {step_bytes} B exceeds vmem limit {vmem_limit} B; "
            "pass a smaller block_rows / block_cols")

    if pad:
        output1 = jnp.pad(output1, ((0, pad), (0, 0)))
        output2 = jnp.pad(output2, ((0, pad), (0, 0)))
        label = jnp.pad(label, ((0, pad), (0, 0)))

    kernel = functools.partial(
        _contrastive_kernel, margin=float(margin), batch=B, tile_rows=tb,
        tiles_per_slice=tiles_per_slice, d_tiles=d_tiles,
        label_resident=label_resident, needs_mask=(pad != 0))

    x_map = lambda s, t, k: (s * tiles_per_slice + t, k)
    if label_resident:
        lab_spec = pl.BlockSpec((b_padded, 1), lambda s, t, k: (0, 0))   # fetched once
    else:
        lab_spec = pl.BlockSpec((tb, 1), lambda s, t, k: (s * tiles_per_slice + t, 0))

    scratch = []
    if d_tiles > 1:
        scratch.append(pltpu.VMEM((tb, 1), jnp.float32))

    cost = pl.CostEstimate(
        flops=4 * B * D + 10 * B,
        transcendentals=B,
        bytes_accessed=2 * B * D * itemsize + B * 4 + n_slices * 8 * 128 * 4)

    if n_slices == 2:
        # CORE_PARALLEL is what actually shards a grid axis across v7x's 2 TCs;
        # keep a plain-"parallel" fallback in case it is rejected.
        semantics_options = [
            (pltpu.CORE_PARALLEL, pltpu.ARBITRARY, pltpu.ARBITRARY),
            ("parallel", "arbitrary", "arbitrary"),
        ]
    else:
        semantics_options = [("arbitrary", "arbitrary", "arbitrary")]

    out = None
    last_err = None
    for sem in semantics_options:
        try:
            out = pl.pallas_call(
                kernel,
                out_shape=jax.ShapeDtypeStruct((n_slices * 8, 128), jnp.float32),
                grid=(n_slices, tiles_per_slice, d_tiles),
                in_specs=[pl.BlockSpec((tb, td), x_map),
                          pl.BlockSpec((tb, td), x_map),
                          lab_spec],
                out_specs=pl.BlockSpec((8, 128), lambda s, t, k: (s, 0)),
                scratch_shapes=scratch,
                compiler_params=pltpu.CompilerParams(
                    dimension_semantics=sem, vmem_limit_bytes=vmem_limit),
                cost_estimate=cost,
            )(output1, output2, label)
            break
        except Exception as e:  # CORE_PARALLEL fallback path
            last_err = e
            out = None
    if out is None:
        raise last_err

    # One partial mean per slice (broadcast over its (8, 128) block) -> sum.
    return jnp.sum(out[::8, 0])


def _reference(output1, output2, label, margin=DEFAULT_MARGIN):
    # Pure-JAX reference mirroring the PyTorch module, for sanity checking.
    x1 = output1.astype(jnp.float32)
    x2 = output2.astype(jnp.float32)
    lab = label.reshape(-1).astype(jnp.float32)
    d = jnp.sqrt(jnp.sum((x1 - x2 + EPS) ** 2, axis=-1))
    return jnp.mean((1.0 - lab) * d ** 2
                    + lab * jnp.maximum(margin - d, 0.0) ** 2)


if __name__ == "__main__":
    key = jax.random.PRNGKey(0)
    k1, k2, k3, k4, k5, k6 = jax.random.split(key, 6)

    # Case 1: small single-tile case (matches the module's (batch, features) layout).
    B, D = 8, 32
    x1 = jax.random.normal(k1, (B, D), dtype=jnp.float32)
    x2 = jax.random.normal(k2, (B, D), dtype=jnp.float32)
    lab = jax.random.bernoulli(k3, 0.5, (B,)).astype(jnp.float32)
    loss = jax.block_until_ready(contrastive_loss(x1, x2, lab))
    ref = _reference(x1, x2, lab)
    assert jnp.allclose(loss, ref, rtol=1e-5, atol=1e-5), (loss, ref)

    # Case 2: ragged multi-tile batch with the streamed (non-resident) label path
    # (exercises masking gate + accumulator init/finalize on the reduction axis).
    B2, D2 = 100, 96
    y1 = jax.random.normal(k4, (B2, D2), dtype=jnp.float32)
    y2 = jax.random.normal(k5, (B2, D2), dtype=jnp.float32)
    lab2 = jax.random.bernoulli(k6, 0.5, (B2,)).astype(jnp.float32)
    loss2 = jax.block_until_ready(
        contrastive_loss(y1, y2, lab2, block_rows=16, label_resident=False))
    ref2 = _reference(y1, y2, lab2)
    assert jnp.allclose(loss2, ref2, rtol=1e-5, atol=1e-5), (loss2, ref2)

    # Case 3: native bf16 ingest (in-kernel cast), ragged single tile, resident label.
    z1 = jax.random.normal(k1, (37, 64), dtype=jnp.bfloat16)
    z2 = jax.random.normal(k2, (37, 64), dtype=jnp.bfloat16)
    lab3 = jax.random.bernoulli(k3, 0.5, (37,)).astype(jnp.float32)
    loss3 = jax.block_until_ready(contrastive_loss(z1, z2, lab3))
    ref3 = _reference(z1, z2, lab3)
    assert jnp.allclose(loss3, ref3, rtol=1e-4, atol=1e-4), (loss3, ref3)

    # Case 4: feature-axis (D) reduction tiling with the per-row d^2 accumulator.
    B4, D4 = 50, 256
    w1 = jax.random.normal(k4, (B4, D4), dtype=jnp.float32)
    w2 = jax.random.normal(k5, (B4, D4), dtype=jnp.float32)
    lab4 = jax.random.bernoulli(k6, 0.5, (B4,)).astype(jnp.float32)
    loss4 = jax.block_until_ready(
        contrastive_loss(w1, w2, lab4, block_rows=16, block_cols=128))
    ref4 = _reference(w1, w2, lab4)
    assert jnp.allclose(loss4, ref4, rtol=1e-5, atol=1e-5), (loss4, ref4)

    print("KERNEL_OK")
</pallas_src>

<mosaic_0001>
module attributes {stable_mosaic.version = 11 : i64} {
  func.func @_contrastive_kernel(%arg0: i32, %arg1: i32, %arg2: i32, %arg3: memref<8x32xf32, #tpu.memory_space<vmem>>, %arg4: memref<8x32xf32, #tpu.memory_space<vmem>>, %arg5: memref<8x1xf32, #tpu.memory_space<vmem>>, %arg6: memref<8x128xf32, #tpu.memory_space<vmem>>) attributes {dimension_semantics = [#tpu.dimension_semantics<arbitrary>, #tpu.dimension_semantics<arbitrary>, #tpu.dimension_semantics<arbitrary>], iteration_bounds = array<i64: 1, 1, 1>, scalar_prefetch = 0 : i64, scratch_operands = 0 : i64, tpu.core_type = #tpu.core_type<tc>, window_params = [{transform_indices = @transform_0, window_bounds = array<i64: 8, 32>}, {transform_indices = @transform_1, window_bounds = array<i64: 8, 32>}, {pipeline_mode = #tpu.pipeline_mode<synchronous>, transform_indices = @transform_2, window_bounds = array<i64: 8, 1>}, {transform_indices = @transform_3, window_bounds = array<i64: 8, 128>}]} {
    %c1_i32 = arith.constant 1 : i32
    %0 = arith.muli %arg0, %c1_i32 : i32
    %1 = arith.addi %0, %arg1 : i32
    %c8_i32 = arith.constant 8 : i32
    %2 = arith.muli %1, %c8_i32 : i32
    %c0_i32 = arith.constant 0 : i32
    %3 = arith.cmpi eq, %arg1, %c0_i32 : i32
    %c0_i32_0 = arith.constant 0 : i32
    %4 = arith.cmpi eq, %arg2, %c0_i32_0 : i32
    %5 = arith.andi %3, %4 : i1
    %6 = arith.extui %5 : i1 to i32
    %c0_i32_1 = arith.constant 0 : i32
    %7 = arith.cmpi ne, %6, %c0_i32_1 : i32
    scf.if %7 {
      %cst_18 = arith.constant 0.000000e+00 : f32
      %41 = vector.broadcast %cst_18 : f32 to vector<8x128xf32>
      %c0_19 = arith.constant 0 : index
      %c0_20 = arith.constant 0 : index
      %42 = vector.load %arg6[%c0_19, %c0_20] : memref<8x128xf32, #tpu.memory_space<vmem>>, vector<8x128xf32>
      tpu.vector_store %arg6[%c0_19, %c0_20], %41 {strides = array<i32>} : memref<8x128xf32, #tpu.memory_space<vmem>>, vector<8x128xf32>,
    } else {
    }
    %c0 = arith.constant 0 : index
    %c0_2 = arith.constant 0 : index
    %8 = vector.load %arg3[%c0, %c0_2] : memref<8x32xf32, #tpu.memory_space<vmem>>, vector<8x32xf32>
    %c0_3 = arith.constant 0 : index
    %c0_4 = arith.constant 0 : index
    %9 = vector.load %arg4[%c0_3, %c0_4] : memref<8x32xf32, #tpu.memory_space<vmem>>, vector<8x32xf32>
    %10 = arith.subf %8, %9 : vector<8x32xf32>
    %cst = arith.constant 9.99999997E-7 : f32
    %11 = vector.broadcast %cst : f32 to vector<8x32xf32>
    %12 = arith.addf %10, %11 : vector<8x32xf32>
    %13 = arith.mulf %12, %12 : vector<8x32xf32>
    %cst_5 = arith.constant dense<0.000000e+00> : vector<8xf32>
    %14 = vector.multi_reduction <add>, %13, %cst_5 [1] : vector<8x32xf32> to vector<8xf32>
    %15 = vector.shape_cast %14 : vector<8xf32> to vector<8x1xf32>
    %16 = math.sqrt %15 : vector<8x1xf32>
    %cst_6 = arith.constant 2.000000e+00 : f32
    %17 = vector.broadcast %cst_6 : f32 to vector<8x1xf32>
    %18 = arith.subf %17, %16 : vector<8x1xf32>
    %cst_7 = arith.constant 0.000000e+00 : f32
    %19 = vector.broadcast %cst_7 : f32 to vector<8x1xf32>
    %20 = arith.maximumf %18, %19 : vector<8x1xf32>
    %21 = tpu.assume_multiple %2, 8 : i32
    %22 = arith.index_cast %21 : i32 to index
    %c0_8 = arith.constant 0 : index
    %23 = vector.load %arg5[%22, %c0_8] : memref<8x1xf32, #tpu.memory_space<vmem>>, vector<8x1xf32>
    %cst_9 = arith.constant 1.000000e+00 : f32
    %24 = vector.broadcast %cst_9 : f32 to vector<8x1xf32>
    %25 = arith.subf %24, %23 : vector<8x1xf32>
    %26 = arith.mulf %25, %15 : vector<8x1xf32>
    %27 = arith.mulf %20, %20 : vector<8x1xf32>
    %28 = arith.mulf %23, %27 : vector<8x1xf32>
    %29 = arith.addf %26, %28 : vector<8x1xf32>
    %c0_10 = arith.constant 0 : index
    %c0_11 = arith.constant 0 : index
    %30 = vector.load %arg6[%c0_10, %c0_11] : memref<8x128xf32, #tpu.memory_space<vmem>>, vector<8x128xf32>
    %cst_12 = arith.constant dense<0.000000e+00> : vector<1xf32>
    %31 = vector.multi_reduction <add>, %29, %cst_12 [0] : vector<8x1xf32> to vector<1xf32>
    %32 = vector.shape_cast %31 : vector<1xf32> to vector<1x1xf32>
    %33 = vector.broadcast %32 : vector<1x1xf32> to vector<8x128xf32>
    %34 = arith.addf %30, %33 : vector<8x128xf32>
    %c0_13 = arith.constant 0 : index
    %c0_14 = arith.constant 0 : index
    %35 = vector.load %arg6[%c0_13, %c0_14] : memref<8x128xf32, #tpu.memory_space<vmem>>, vector<8x128xf32>
    tpu.vector_store %arg6[%c0_13, %c0_14], %34 {strides = array<i32>} : memref<8x128xf32, #tpu.memory_space<vmem>>, vector<8x128xf32>,
    %c0_i32_15 = arith.constant 0 : i32
    %36 = arith.cmpi eq, %arg1, %c0_i32_15 : i32
    %c0_i32_16 = arith.constant 0 : i32
    %37 = arith.cmpi eq, %arg2, %c0_i32_16 : i32
    %38 = arith.andi %36, %37 : i1
    %39 = arith.extui %38 : i1 to i32
    %c0_i32_17 = arith.constant 0 : i32
    %40 = arith.cmpi ne, %39, %c0_i32_17 : i32
    scf.if %40 {
      %c0_18 = arith.constant 0 : index
      %c0_19 = arith.constant 0 : index
      %41 = vector.load %arg6[%c0_18, %c0_19] : memref<8x128xf32, #tpu.memory_space<vmem>>, vector<8x128xf32>
      %cst_20 = arith.constant 1.250000e-01 : f32
      %42 = vector.broadcast %cst_20 : f32 to vector<8x128xf32>
      %43 = arith.mulf %41, %42 : vector<8x128xf32>
      %c0_21 = arith.constant 0 : index
      %c0_22 = arith.constant 0 : index
      %44 = vector.load %arg6[%c0_21, %c0_22] : memref<8x128xf32, #tpu.memory_space<vmem>>, vector<8x128xf32>
      tpu.vector_store %arg6[%c0_21, %c0_22], %43 {strides = array<i32>} : memref<8x128xf32, #tpu.memory_space<vmem>>, vector<8x128xf32>,
    } else {
    }
    return
  }
  func.func @transform_0(%arg0: i32, %arg1: i32, %arg2: i32) -> (i32, i32) {
    %c1_i32 = arith.constant 1 : i32
    %0 = arith.muli %arg0, %c1_i32 : i32
    %1 = arith.addi %0, %arg1 : i32
    %c0_i32 = arith.constant 0 : i32
    return %1, %arg2 : i32, i32
  }
  func.func @transform_1(%arg0: i32, %arg1: i32, %arg2: i32) -> (i32, i32) {
    %c1_i32 = arith.constant 1 : i32
    %0 = arith.muli %arg0, %c1_i32 : i32
    %1 = arith.addi %0, %arg1 : i32
    %c0_i32 = arith.constant 0 : i32
    return %1, %arg2 : i32, i32
  }
  func.func @transform_2(%arg0: i32, %arg1: i32, %arg2: i32) -> (i32, i32) {
    %c0_i32 = arith.constant 0 : i32
    %c0_i32_0 = arith.constant 0 : i32
    %c0_i32_1 = arith.constant 0 : i32
    return %c0_i32, %c0_i32_0 : i32, i32
  }
  func.func @transform_3(%arg0: i32, %arg1: i32, %arg2: i32) -> (i32, i32) {
    %c0_i32 = arith.constant 0 : i32
    %c0_i32_0 = arith.constant 0 : i32
    return %arg0, %c0_i32 : i32, i32
  }
}

</mosaic_0001>

<llo_original>
// kernel: tpu_custom_call.1
$region0: #{tpu_custom_call.1}
  #allocation0 [shape = 'u32[]', space=smem, size = 0x4, offset = 0x4, fixed_abs, tag = 'smem constant byte address 0x4 - core index']
  #allocation1 [shape = 'u32[72,128]{1,0:T(1,128)}', space=vmem, size = 0x9000, scoped, tag = 'internal scratch']
  %s0 = inlined_call_operand.vmem [shape: f32[8,32], index: 0, kind: input, shape index: {}]
  %s1 = inlined_call_operand.hbm [shape: f32[8,32], index: 1, kind: input, shape index: {}]
  %s2 = inlined_call_operand.vmem [shape: f32[8,1], index: 2, kind: input, shape index: {}]
  %s3 = inlined_call_operand.hbm [shape: f32[8,128], index: 3, kind: output, shape index: {}]
  %s4 = sld [smem:[#allocation0]]
  $region34: #{tpu_custom_call.1} parent=0
    _
  %s6 = ssub.s32 1, %s4
  %s7 = scalar_select 0, %s6, %s4
  $region1: #{tpu_custom_call.1} parent=0
    #allocation2 [shape = 'u8[4096]{0}', space=vmem, size = 0x1000, scoped, tag = 'input window, operand 1, single buffered']
    #allocation3 [shape = 's32[1]{0}', space=sflag, size = 0x4, scoped, tag = 'scoped memory for tpu_custom_call.1']
    #allocation4 [shape = 's32[1]{0}', space=sflag, size = 0x4, scoped, tag = 'scoped memory for tpu_custom_call.1']
    #allocation5 [shape = 'u8[4096]{0}', space=vmem, size = 0x1000, scoped, tag = 'output window, operand 0, single buffered']
    %8 = vsyncpa [#allocation3], 0
    %9 = vsyncpa [#allocation4], 0
    // Predicated region
    $region2: #{tpu_custom_call.1} parent=1 // pred_check
      _
    $region3: #{tpu_custom_call.1} parent=1 // pred_check_branch
      %11 = sbr.rel (0) target = $region5
    $region4: #{tpu_custom_call.1} parent=1 // pred_region
      %s12 = sadd.s32 0, 0
      %p13 = scmp.lt.s32.totalorder %s12, 0
      %s14 = scalar_select %p13, %s12, 0
      %s15 = smul.addr %s14, 8
      %s16 = scalar_lea.vmem %s0, %s15
      %s17 = sadd.s32 0, 0
    $region5: #{tpu_custom_call.1} parent=1 // pred_fallthru
      _
    // Predicated region
    $region6: #{tpu_custom_call.1} parent=1 // pred_check
      _
    $region7: #{tpu_custom_call.1} parent=1 // pred_check_branch
      %19 = sbr.rel (0) target = $region9
    $region8: #{tpu_custom_call.1} parent=1 // pred_region
      %s20 = sadd.s32 0, 0
      %22 = vsyncadd [#allocation3], 0
      %s23 = smul.addr %s20, 8
      %s24 = scalar_lea.hbm %s1, %s23
      %s26 = sshll.u32 %s24, 4
      %s27 = int_to_ptr.hbm [resolvable:$true] %s26
      %s28 = sshll.u32 [#allocation2], 4
      %s29 = int_to_ptr.vmem [resolvable:$true] %s28
      %31 = dma.hbm_to_vmem [thread:$0]  %s27, 128, %s29, [#allocation3]
    $region9: #{tpu_custom_call.1} parent=1 // pred_fallthru
      _
    // Predicated region
    $region10: #{tpu_custom_call.1} parent=1 // pred_check
      _
    $region11: #{tpu_custom_call.1} parent=1 // pred_check_branch
      %33 = sbr.rel (0) target = $region13
    $region12: #{tpu_custom_call.1} parent=1 // pred_region
      _
    $region13: #{tpu_custom_call.1} parent=1 // pred_fallthru
      _
    // Predicated region
    $region14: #{tpu_custom_call.1} parent=1 // pred_check
      _
    $region15: #{tpu_custom_call.1} parent=1 // pred_check_branch
      %35 = sbr.rel (0) target = $region17
    $region16: #{tpu_custom_call.1} parent=1 // pred_region
      %37 = dma.done [#allocation3], 128
    $region17: #{tpu_custom_call.1} parent=1 // pred_fallthru
      _
    %s38 = sadd.s32 0, 0
    %p39 = scmp.lt.s32.totalorder %s38, 0
    %s40 = scalar_select %p39, %s38, 0
    %s41 = smul.addr %s40, 8
    %s42 = scalar_lea.vmem %s0, %s41
    %s43 = sadd.s32 0, 0
    %p44 = scmp.lt.s32.totalorder %s43, 0
    %s45 = scalar_select %p44, %s43, 0
    %s46 = smul.addr %s45, 8
    %s47 = scalar_lea.vmem %s0, %s46
    %s48 = sadd.s32 0, 0
    %s49 = sadd.s32 0, 0
    %s50 = sadd.s32 0, 0
    %s51 = smul.u32 %s50, 8
    %p52 = scmp.eq.s32.totalorder 0, 0
    %p53 = scmp.eq.s32.totalorder 0, 0
    %p54 = pnand %p52, %p53
    %p55 = pneg %p54
    // Predicated region
    $region18: #{tpu_custom_call.1} parent=1 // pred_check
      _
    $region19: #{tpu_custom_call.1} parent=1 // pred_check_branch
      %57 = sbr.rel (%p54) target = $region21
    $region20: #{tpu_custom_call.1} parent=1 // pred_region
      %58 = vst [vmem:[#allocation5] sm:$0xff] 0.0
    $region21: #{tpu_custom_call.1} parent=1 // pred_fallthru
      _
    %v59 = vld [vmem:[%s47] sm:$0xff]
    %v60 = vld [vmem:[#allocation2] sm:$0xff]
    %v61 = vsub.f32 %v59, %v60
    %v62 = vadd.f32 %v61, 1e-06
    %v63 = vmul.f32 %v62, %v62
    %vm64 = vcmask 261120
    %v65 = vsel %vm64, %v63, 0.0
    %66 = vadd.xlane.f32.xlu0 %v65
    %v67 = vpop.xlane.xlu0 %66
    %v68 = vrsqrt.pop %v67
    %v69 = vmul.f32 %v68, %v67
    %v70 = vmul.f32 %v69, %v68
    %v71 = vmul.f32 0.5, %v70
    %v72 = vsub.f32 1.5, %v71
    %v73 = vmul.f32 %v68, %v72
    %v74 = vmul.f32 %v67, %v73
    %vm75 = vcmp.eq.f32.partialorder %v67, inf
    %v76 = vsel %vm75, %v67, %v74
    %vm77 = vcmp.eq.f32.partialorder %v67, 0.0
    %v78 = vand.u32 %v67, 2147483648
    %v79 = vsel %vm77, %v78, %v76
    %v80 = vsub.f32 2.0, %v79
    %v81 = vmax.f32 %v80, 0.0
    %s82 = scalar_lea.vmem %s2, %s51
    %v83 = vld [vmem:[%s82] sm:$0xff]
    %v84 = vsub.f32 1.0, %v83
    %v85 = vmul.f32 %v84, %v67
    %v86 = vmul.f32 %v81, %v81
    %v87 = vmul.f32 %v83, %v86
    %v88 = vadd.f32 %v85, %v87
    %v89 = vld [vmem:[#allocation5] sm:$0xff]
    %vm90 = vcmask 7168
    %v91 = vsel %vm90, %v88, 0.0
    %v92 = vrot.slane %v91, 4
    %v93 = vadd.f32 %v91, %v92
    %v94 = vrot.slane %v93, 2
    %v95 = vadd.f32 %v93, %v94
    %v96 = vrot.slane %v95, 1
    %v97 = vadd.f32 %v95, %v96
    %99 = vset.pattern.permute.xlu0 0
    %100 = vperm.xlu0 %99, %v97
    %v101 = vpop.permute.xlu0 %100
    %v103 = vadd.f32 %v89, %v101
    %104 = vst [vmem:[#allocation5] sm:$0xff] %v103
    // Predicated region
    $region22: #{tpu_custom_call.1} parent=1 // pred_check
      _
    $region23: #{tpu_custom_call.1} parent=1 // pred_check_branch
      %106 = sbr.rel (%p54) target = $region25
    $region24: #{tpu_custom_call.1} parent=1 // pred_region
      %v107 = vld [vmem:[#allocation5] sm:$0xff]
      %v108 = vmul.f32 %v107, 0.125
      %109 = vst [vmem:[#allocation5] sm:$0xff] %v108
    $region25: #{tpu_custom_call.1} parent=1 // pred_fallthru
      _
    // Predicated region
    $region26: #{tpu_custom_call.1} parent=1 // pred_check
      _
    $region27: #{tpu_custom_call.1} parent=1 // pred_check_branch
      %111 = sbr.rel (0) target = $region29
    $region28: #{tpu_custom_call.1} parent=1 // pred_region
      %113 = vsyncadd [#allocation4], 0
      %s115 = sshll.u32 [#allocation5], 4
      %s116 = int_to_ptr.vmem [resolvable:$true] %s115
      %s117 = sshll.u32 %s3, 4
      %s118 = int_to_ptr.hbm [resolvable:$true] %s117
      %120 = dma.vmem_to_hbm [thread:$0]  %s116, 128, %s118, [#allocation4]
    $region29: #{tpu_custom_call.1} parent=1 // pred_fallthru
      _
    // Predicated region
    $region30: #{tpu_custom_call.1} parent=1 // pred_check
      _
    $region31: #{tpu_custom_call.1} parent=1 // pred_check_branch
      %122 = sbr.rel (0) target = $region33
    $region32: #{tpu_custom_call.1} parent=1 // pred_region
      %124 = dma.done [#allocation4], 128
    $region33: #{tpu_custom_call.1} parent=1 // pred_fallthru
      _
    %125 = vsyncpa [#allocation3], 1
    %126 = vsyncpa [#allocation4], 1

</llo_original>
